<compile_context>
chip_gen: v7x
topology: tpu7x:2x2x1
jax: 0.10.0
libtpu: 0.0.40
codegen_flags: <defaults>
</compile_context>

<pallas_src>
import functools
import math

import jax
import jax.numpy as jnp
import numpy as np
from jax.experimental import pallas as pl
from jax.experimental.pallas import tpu as pltpu

_EPS = 1e-6
_VMEM_TILE_BUDGET = 10 * 1024 * 1024     # double-buffered output-tile budget (bytes)
_VMEM_LIMIT = 48 * 1024 * 1024           # explicit scoped-VMEM limit for pallas_call


def _round_up(x, m):
    return (x + m - 1) // m * m


def _sublane(dtype):
    itemsize = np.dtype(dtype).itemsize
    return max(8, 8 * (4 // max(1, itemsize)))   # 8 for f32, 16 for bf16, 32 for fp8


def _choose_row_tile(n_rows, row_bytes, *, sublane=8, min_grid=2,
                     vmem_budget=_VMEM_TILE_BUDGET):
    """Row-tile height for a (n_rows, lanes) lane-dense output block.

    Returns th that is either a multiple of `sublane` or equal to n_rows, keeps
    the double-buffered tile under `vmem_budget`, and yields >= min_grid grid
    steps whenever n_rows allows it (keeps both v7x TensorCores busy).
    Partial last blocks are allowed: grid = pl.cdiv(n_rows, th).
    """
    if n_rows <= sublane:
        return n_rows
    budget_rows = max(sublane,
                      (vmem_budget // (2 * max(1, row_bytes))) // sublane * sublane)
    grid_cap = n_rows
    if n_rows >= min_grid * sublane:
        grid_cap = max(sublane, (n_rows // min_grid) // sublane * sublane)
    return max(sublane, min(budget_rows, grid_cap, n_rows))


# ---------------------------------------------------------------------------
# Kernels
# ---------------------------------------------------------------------------
def _pe_hwc_kernel(y_mul_ref, y_add_ref, x_row_ref, out_ref, *,
                   h, scale, normalize, n_rep):
    """One (TH, WC_pad) lane-dense row tile of the (H, W*C) encoding.

    y-channel values depend only on the global row index and repeat along lanes
    with the period baked into y_mul/y_add (one vreg wide when possible), so sin
    is evaluated on a small (TH, rep) slab and replicated by a whole-vreg lane
    concat.  The row-invariant x half is precomputed host-side (x_row) and
    folded in with a single add (the slab is exactly 0 at x lanes).
    """
    th = out_ref.shape[0]
    r0 = pl.program_id(0) * th
    pos_y = (jax.lax.broadcasted_iota(jnp.int32, (th, 1), 0) + r0).astype(jnp.float32)
    if normalize:
        pos_y = pos_y / (float(h - 1) + _EPS) * scale
    y_blk = jnp.sin(pos_y * y_mul_ref[...] + y_add_ref[...])            # (TH, rep)
    y_full = y_blk if n_rep == 1 else jnp.concatenate([y_blk] * n_rep, axis=-1)
    out_ref[...] = (y_full + x_row_ref[...]).astype(out_ref.dtype)      # full-width store


def _pe_chw_kernel(mul_ref, add_ref, isx_ref, posx_ref, posy_ref, out_ref):
    """One (TC, HW_pad) lane-dense channel tile of the (C, H*W) encoding.

    Per-channel scalars (inv_freq, sin/cos offset, x-or-y selector) arrive as
    (TC, 1) columns; the two per-lane position rows are precomputed host-side.
    Emitting this layout directly avoids the extra HBM transpose pass.
    # TODO(synk): lane-periodic dedup (period W for x rows, runs of W for y rows)
    # could cut the sin work here too; kept full-width for simplicity.
    """
    isx = isx_ref[...]                                                   # (TC, 1)
    pos = isx * posx_ref[...] + (1.0 - isx) * posy_ref[...]              # (TC, HW)
    phase = pos * mul_ref[...] + add_ref[...]
    out_ref[...] = jnp.sin(phase).astype(out_ref.dtype)


# ---------------------------------------------------------------------------
# Encoding builders (single batch-invariant slab)
# ---------------------------------------------------------------------------
def _hwc_encoding(h, w, dim, dtype, scale, temperature, normalize):
    C = 2 * dim
    wc = w * C
    wc_pad = _round_up(wc, 128)

    # Replication width for the in-kernel sin slab.
    if C <= 128 and 128 % C == 0:
        rep = 128                    # one vreg holds an integer number of C-periods
    elif C % 128 == 0:
        rep = C                      # one period is already a multiple of a vreg
    else:
        # TODO(synk): C neither divides nor is a multiple of 128 — full-width sin
        # fallback (not hit by realistic matanyone configs).
        rep = wc_pad
    if wc_pad % rep != 0:
        rep = wc_pad
    n_rep = wc_pad // rep

    # ---- host-side lane constants (numpy, static shapes only) ---------------
    k = np.arange(rep)
    c = k % C
    is_y = c >= dim
    cy = np.where(is_y, c - dim, 0)
    fy = 1.0 / (temperature ** ((cy - cy % 2).astype(np.float64) / dim))
    y_mul = np.where(is_y, fy, 0.0).astype(np.float32).reshape(1, rep)
    y_add = np.where(is_y & (cy % 2 == 1), 0.5 * np.pi, 0.0).astype(np.float32).reshape(1, rep)

    kk = np.arange(wc_pad)
    cc = kk % C
    w_idx = np.minimum(kk // C, w - 1)                     # clamp lanes in the padding
    is_x = (cc < dim) & (kk < wc)
    fx = 1.0 / (temperature ** ((cc - cc % 2).astype(np.float64) / dim))
    pos_x = w_idx.astype(np.float64)
    if normalize:
        pos_x = pos_x / (float(w - 1) + _EPS) * scale
    sx = pos_x * fx
    x_val = np.where(cc % 2 == 0, np.sin(sx), np.cos(sx))
    x_row = np.where(is_x, x_val, 0.0).astype(np.float32).reshape(1, wc_pad)

    # ---- lane-dense, H-tiled pallas_call -------------------------------------
    itemsize = np.dtype(dtype).itemsize
    th = _choose_row_tile(h, wc_pad * itemsize, sublane=_sublane(dtype))
    grid = (pl.cdiv(h, th),)

    kernel = functools.partial(_pe_hwc_kernel, h=h, scale=float(scale),
                               normalize=normalize, n_rep=n_rep)
    enc_flat = pl.pallas_call(
        kernel,
        out_shape=jax.ShapeDtypeStruct((h, wc_pad), dtype),
        grid=grid,
        in_specs=[
            pl.BlockSpec((1, rep), lambda i: (0, 0)),
            pl.BlockSpec((1, rep), lambda i: (0, 0)),
            pl.BlockSpec((1, wc_pad), lambda i: (0, 0)),
        ],
        out_specs=pl.BlockSpec((th, wc_pad), lambda i: (i, 0)),
        compiler_params=pltpu.CompilerParams(
            dimension_semantics=("parallel",),
            vmem_limit_bytes=_VMEM_LIMIT,
        ),
    )(jnp.asarray(y_mul), jnp.asarray(y_add), jnp.asarray(x_row))

    if wc_pad != wc:
        enc_flat = enc_flat[:, :wc]
    return enc_flat.reshape(h, w, C)


def _chw_encoding(h, w, dim, dtype, scale, temperature, normalize):
    C = 2 * dim
    hw = h * w
    hw_pad = _round_up(hw, 128)

    # per-lane position rows (row-major over (h, w)); padding lanes clamped.
    l = np.arange(hw_pad)
    h_idx = np.minimum(l // w, h - 1).astype(np.float64)
    w_idx = (l % w).astype(np.float64)
    if normalize:
        h_idx = h_idx / (float(h - 1) + _EPS) * scale
        w_idx = w_idx / (float(w - 1) + _EPS) * scale
    posy_row = h_idx.astype(np.float32).reshape(1, hw_pad)
    posx_row = w_idx.astype(np.float32).reshape(1, hw_pad)

    # per-channel columns
    c = np.arange(C)
    is_x = c < dim
    cc = np.where(is_x, c, c - dim)
    f = 1.0 / (temperature ** ((cc - cc % 2).astype(np.float64) / dim))
    mul_col = f.astype(np.float32).reshape(C, 1)
    add_col = np.where(cc % 2 == 1, 0.5 * np.pi, 0.0).astype(np.float32).reshape(C, 1)
    isx_col = is_x.astype(np.float32).reshape(C, 1)

    itemsize = np.dtype(dtype).itemsize
    tc = _choose_row_tile(C, hw_pad * itemsize, sublane=_sublane(dtype))
    grid = (pl.cdiv(C, tc),)

    enc_flat = pl.pallas_call(
        _pe_chw_kernel,
        out_shape=jax.ShapeDtypeStruct((C, hw_pad), dtype),
        grid=grid,
        in_specs=[
            pl.BlockSpec((tc, 1), lambda i: (i, 0)),
            pl.BlockSpec((tc, 1), lambda i: (i, 0)),
            pl.BlockSpec((tc, 1), lambda i: (i, 0)),
            pl.BlockSpec((1, hw_pad), lambda i: (0, 0)),
            pl.BlockSpec((1, hw_pad), lambda i: (0, 0)),
        ],
        out_specs=pl.BlockSpec((tc, hw_pad), lambda i: (i, 0)),
        compiler_params=pltpu.CompilerParams(
            dimension_semantics=("parallel",),
            vmem_limit_bytes=_VMEM_LIMIT,
        ),
    )(jnp.asarray(mul_col), jnp.asarray(add_col), jnp.asarray(isx_col),
      jnp.asarray(posx_row), jnp.asarray(posy_row))

    if hw_pad != hw:
        enc_flat = enc_flat[:, :hw]
    return enc_flat.reshape(C, h, w)


# ---------------------------------------------------------------------------
# Public wrapper (matches PositionalEncoding.forward semantics)
# ---------------------------------------------------------------------------
def positional_encoding(x, orig_dim, *, scale=math.pi * 2, temperature=10000.0,
                        normalize=True, channel_last=True, transpose_output=False):
    """x: 4d (B,H,W,C)/(B,C,H,W) or 5d (B,K,H,W,C)/(B,K,C,H,W).
    Returns the positional encoding with the PyTorch module's layout semantics
    (dim = ceil(orig_dim/4)*2, output channels = 2*dim; 5d input -> K=1 output,
    broadcastable along K)."""
    if x.ndim not in (4, 5):
        raise RuntimeError(f"The input tensor has to be 4/5d, got {x.shape}!")
    has_objects = x.ndim == 5
    if has_objects:
        x = x[:, 0]
    if channel_last:
        batch_size, h, w, _ = x.shape
    else:
        batch_size, _, h, w = x.shape

    dim = int(np.ceil(orig_dim / 4) * 2)
    out_dtype = x.dtype

    # PyTorch layout rule reduces to: output is (C, H, W) iff channel_last == transpose_output.
    want_chw = (channel_last == transpose_output)
    if want_chw:
        enc = _chw_encoding(h, w, dim, out_dtype, float(scale), float(temperature), normalize)
    else:
        enc = _hwc_encoding(h, w, dim, out_dtype, float(scale), float(temperature), normalize)

    # Batch handled by a lazy broadcast of the single batch-invariant slab.
    # TODO(synk): if a consumer forces materialization of this broadcast, the B x
    # HBM-write saving is lost; consider returning the (1, ...) slab instead.
    penc = jnp.broadcast_to(enc[None], (batch_size,) + enc.shape)
    if has_objects:
        penc = penc[:, None]               # broadcastable along the object (K) dim
    return penc


# ---------------------------------------------------------------------------
# Pure-JAX reference (channel_last default path) for verification
# ---------------------------------------------------------------------------
def _reference(x, orig_dim, scale=math.pi * 2, temperature=10000.0, normalize=True):
    if x.ndim == 5:
        x = x[:, 0]
    b, h, w, _ = x.shape
    dim = int(np.ceil(orig_dim / 4) * 2)
    inv_freq = 1.0 / (temperature ** (jnp.arange(0, dim, 2, dtype=jnp.float32) / dim))
    pos_y = jnp.arange(h, dtype=jnp.float32)
    pos_x = jnp.arange(w, dtype=jnp.float32)
    if normalize:
        pos_y = pos_y / (pos_y[-1] + 1e-6) * scale
        pos_x = pos_x / (pos_x[-1] + 1e-6) * scale
    sy = jnp.einsum("i,j->ij", pos_y, inv_freq)
    sx = jnp.einsum("i,j->ij", pos_x, inv_freq)

    def get_emb(s):
        return jnp.stack((jnp.sin(s), jnp.cos(s)), axis=-1).reshape(s.shape[0], -1)

    emb_y = get_emb(sy)[:, None, :]
    emb_x = get_emb(sx)[None, :, :]
    emb = jnp.concatenate(
        [jnp.broadcast_to(emb_x, (h, w, dim)), jnp.broadcast_to(emb_y, (h, w, dim))],
        axis=-1,
    ).astype(x.dtype)
    return jnp.broadcast_to(emb[None], (b, h, w, 2 * dim))


if __name__ == "__main__":
    key = jax.random.PRNGKey(0)
    B, H, W, Cin = 2, 16, 16, 32
    x = jax.random.normal(key, (B, H, W, Cin), dtype=jnp.float32)       # channel-last

    ref = jax.block_until_ready(_reference(x, orig_dim=Cin))

    # 1) default path: channel_last=True, transpose_output=False -> (B, H, W, C)
    out = jax.block_until_ready(positional_encoding(x, orig_dim=Cin))
    assert out.shape == ref.shape, (out.shape, ref.shape)
    np.testing.assert_allclose(np.asarray(out), np.asarray(ref), rtol=1e-5, atol=1e-5)

    # 2) 5d input: output broadcastable along the object dimension (K = 1)
    x5 = jax.random.normal(key, (B, 3, H, W, Cin), dtype=jnp.float32)
    out5 = jax.block_until_ready(positional_encoding(x5, orig_dim=Cin))
    assert out5.shape == (B, 1, H, W, 32), out5.shape
    np.testing.assert_allclose(np.asarray(out5[:, 0]), np.asarray(ref), rtol=1e-5, atol=1e-5)

    # 3) channel_last=False: NCHW output emitted directly by the CHW kernel
    x_nchw = jnp.transpose(x, (0, 3, 1, 2))
    out_nchw = jax.block_until_ready(
        positional_encoding(x_nchw, orig_dim=Cin, channel_last=False))
    np.testing.assert_allclose(np.asarray(out_nchw),
                               np.asarray(jnp.transpose(ref, (0, 3, 1, 2))),
                               rtol=1e-5, atol=1e-5)

    # 4) channel_last=True + transpose_output=True: (B, C, H, W) from the CHW kernel
    out_t = jax.block_until_ready(
        positional_encoding(x, orig_dim=Cin, transpose_output=True))
    np.testing.assert_allclose(np.asarray(out_t),
                               np.asarray(jnp.transpose(ref, (0, 3, 1, 2))),
                               rtol=1e-5, atol=1e-5)

    # 5) ragged shapes: W*C not a multiple of 128 (pad+slice path) and H not a
    #    multiple of the row tile (masked partial last block)
    x_r = jax.random.normal(key, (1, 20, 15, Cin), dtype=jnp.float32)
    out_r = jax.block_until_ready(positional_encoding(x_r, orig_dim=Cin))
    ref_r = jax.block_until_ready(_reference(x_r, orig_dim=Cin))
    np.testing.assert_allclose(np.asarray(out_r), np.asarray(ref_r), rtol=1e-5, atol=1e-5)

    print("KERNEL_OK")
</pallas_src>

<mosaic_0001>
module attributes {stable_mosaic.version = 11 : i64} {
  func.func @_pe_hwc_kernel(%arg0: i32, %arg1: memref<1x128xf32, #tpu.memory_space<vmem>>, %arg2: memref<1x128xf32, #tpu.memory_space<vmem>>, %arg3: memref<1x512xf32, #tpu.memory_space<vmem>>, %arg4: memref<8x512xf32, #tpu.memory_space<vmem>>) attributes {dimension_semantics = [#tpu.dimension_semantics<parallel>], iteration_bounds = array<i64: 2>, scalar_prefetch = 0 : i64, scratch_operands = 0 : i64, tpu.core_type = #tpu.core_type<tc>, window_params = [{pipeline_mode = #tpu.pipeline_mode<synchronous>, transform_indices = @transform_0, window_bounds = array<i64: 1, 128>}, {pipeline_mode = #tpu.pipeline_mode<synchronous>, transform_indices = @transform_1, window_bounds = array<i64: 1, 128>}, {pipeline_mode = #tpu.pipeline_mode<synchronous>, transform_indices = @transform_2, window_bounds = array<i64: 1, 512>}, {transform_indices = @transform_3, window_bounds = array<i64: 8, 512>}]} {
    %c8_i32 = arith.constant 8 : i32
    %0 = arith.muli %arg0, %c8_i32 : i32
    %1 = tpu.iota {dimensions = array<i32: 0>} : vector<8x1xi32>
    %2 = vector.broadcast %0 : i32 to vector<8x1xi32>
    %3 = arith.addi %1, %2 : vector<8x1xi32>
    %4 = arith.sitofp %3 : vector<8x1xi32> to vector<8x1xf32>
    %cst = arith.constant 15.000001 : f32
    %5 = vector.broadcast %cst : f32 to vector<8x1xf32>
    %6 = arith.divf %4, %5 : vector<8x1xf32>
    %cst_0 = arith.constant 6.28318548 : f32
    %7 = vector.broadcast %cst_0 : f32 to vector<8x1xf32>
    %8 = arith.mulf %6, %7 : vector<8x1xf32>
    %c0 = arith.constant 0 : index
    %c0_1 = arith.constant 0 : index
    %9 = vector.load %arg1[%c0, %c0_1] : memref<1x128xf32, #tpu.memory_space<vmem>>, vector<1x128xf32>
    %10 = vector.broadcast %8 : vector<8x1xf32> to vector<8x128xf32>
    %11 = vector.broadcast %9 : vector<1x128xf32> to vector<8x128xf32>
    %12 = arith.mulf %10, %11 : vector<8x128xf32>
    %c0_2 = arith.constant 0 : index
    %c0_3 = arith.constant 0 : index
    %13 = vector.load %arg2[%c0_2, %c0_3] : memref<1x128xf32, #tpu.memory_space<vmem>>, vector<1x128xf32>
    %14 = vector.broadcast %13 : vector<1x128xf32> to vector<8x128xf32>
    %15 = arith.addf %12, %14 : vector<8x128xf32>
    %16 = math.sin %15 : vector<8x128xf32>
    %17 = tpu.concatenate %16, %16, %16, %16 in 1 : vector<8x128xf32>, vector<8x128xf32>, vector<8x128xf32>, vector<8x128xf32> -> vector<8x512xf32>
    %c0_4 = arith.constant 0 : index
    %c0_5 = arith.constant 0 : index
    %18 = vector.load %arg3[%c0_4, %c0_5] : memref<1x512xf32, #tpu.memory_space<vmem>>, vector<1x512xf32>
    %19 = vector.broadcast %18 : vector<1x512xf32> to vector<8x512xf32>
    %20 = arith.addf %17, %19 : vector<8x512xf32>
    %c0_6 = arith.constant 0 : index
    %c0_7 = arith.constant 0 : index
    %21 = vector.load %arg4[%c0_6, %c0_7] : memref<8x512xf32, #tpu.memory_space<vmem>>, vector<8x512xf32>
    tpu.vector_store %arg4[%c0_6, %c0_7], %20 {strides = array<i32>} : memref<8x512xf32, #tpu.memory_space<vmem>>, vector<8x512xf32>,
    return
  }
  func.func @transform_0(%arg0: i32) -> (i32, i32) {
    %c0_i32 = arith.constant 0 : i32
    %c0_i32_0 = arith.constant 0 : i32
    %c0_i32_1 = arith.constant 0 : i32
    return %c0_i32, %c0_i32_0 : i32, i32
  }
  func.func @transform_1(%arg0: i32) -> (i32, i32) {
    %c0_i32 = arith.constant 0 : i32
    %c0_i32_0 = arith.constant 0 : i32
    %c0_i32_1 = arith.constant 0 : i32
    return %c0_i32, %c0_i32_0 : i32, i32
  }
  func.func @transform_2(%arg0: i32) -> (i32, i32) {
    %c0_i32 = arith.constant 0 : i32
    %c0_i32_0 = arith.constant 0 : i32
    %c0_i32_1 = arith.constant 0 : i32
    return %c0_i32, %c0_i32_0 : i32, i32
  }
  func.func @transform_3(%arg0: i32) -> (i32, i32) {
    %c0_i32 = arith.constant 0 : i32
    %c0_i32_0 = arith.constant 0 : i32
    return %arg0, %c0_i32 : i32, i32
  }
}

</mosaic_0001>

<llo_original>
// kernel: tpu_custom_call.1
$region0: #{tpu_custom_call.1}
  #allocation0 [shape = 'u32[]', space=smem, size = 0x4, offset = 0x4, fixed_abs, tag = 'smem constant byte address 0x4 - core index']
  #allocation1 [shape = 'u32[144,128]{1,0:T(1,128)}', space=vmem, size = 0x12000, scoped, tag = 'internal scratch']
  %s0 = inlined_call_operand.hbm [shape: f32[1,128], index: 0, kind: input, shape index: {}]
  %s1 = inlined_call_operand.vmem [shape: f32[1,128], index: 1, kind: input, shape index: {}]
  %s2 = inlined_call_operand.vmem [shape: f32[1,512], index: 2, kind: input, shape index: {}]
  %s3 = inlined_call_operand.hbm [shape: f32[16,512], index: 3, kind: output, shape index: {}]
  %s4 = sld [smem:[#allocation0]]
  $region49: #{tpu_custom_call.1} parent=0
    _
  %s6 = ssub.s32 1, %s4
  %s7 = scalar_select 0, %s6, %s4
  $region1: #{tpu_custom_call.1} parent=0
    #allocation2 [shape = 'u8[512]{0}', space=vmem, size = 0x400, scoped, tag = 'input window, operand 0, single buffered']
    #allocation3 [shape = 's32[2]{0}', space=sflag, size = 0x8, scoped, tag = 'scoped memory for tpu_custom_call.1']
    #allocation4 [shape = 's32[2]{0}', space=sflag, size = 0x8, scoped, tag = 'scoped memory for tpu_custom_call.1']
    #allocation5 [shape = 'u8[32768]{0}', space=vmem, size = 0x8000, scoped, tag = 'output window, operand 0']
    %8 = vsyncpa [#allocation3], 0
    %9 = vsyncpa [#allocation4], 0
    %s10 = scalar_lea.sflag [#allocation4], 1
    %11 = vsyncpa %s10, 0
    loop: start=0, step=1, limit=4
    $region2: #{tpu_custom_call.1} parent=1 // loop_pre_header
      _
    $region3: #{tpu_custom_call.1} parent=1 // loop_header
      %s13 = sphi 0, %s17
      %p14 = scmp.ge.s32.totalorder %s13, 4
      %s21 = sphi 0, %s21
      %s23 = sphi 0, %s21
      %s24 = sphi 0, %s23
      %s38 = sphi 0, %s24
      %s42 = sphi 0, %s42
      %s44 = sphi 0, %s42
      %s45 = sphi 0, %s44
      %s59 = sphi 0, %s45
      %s63 = sphi 0, %s63
      %s65 = sphi 0, %s63
      %s66 = sphi 0, %s65
      %s80 = sphi 0, %s66
      %s86 = sphi 0, %s88
      %s89 = sphi 0, %s86
      %s90 = sphi 0, %s89
      %s106 = sphi 0, %s90
    $region4: #{tpu_custom_call.1} parent=1 // loop_header_branch
      %16 = sbr.rel (%p14) target = $region8
    $region5: #{tpu_custom_call.1} parent=1 // loop_body
      %s18 = ssub.s32 %s13, 1
      %s19 = ssub.s32 %s13, 2
      %s20 = sadd.s32 %s13, 1
      %s22 = sadd.s32 %s21, 1
      %p25 = scmp.eq.s32.totalorder %s13, 1
      %p26 = scmp.ne.s32.totalorder %s21, %s23
      %p27 = scmp.eq.s32.totalorder %s13, 0
      %p28 = por %p26, %p27
      %p29 = scmp.ne.s32.totalorder %s21, %s23
      %p30 = scmp.eq.s32.totalorder %s18, 1
      %p31 = por %p29, %p30
      %p32 = scmp.ne.s32.totalorder %s23, %s24
      %p33 = scmp.eq.s32.totalorder %s18, 0
      %p34 = por %p32, %p33
      %p35 = scmp.ne.s32.totalorder %s23, %s24
      %p36 = scmp.eq.s32.totalorder %s19, 1
      %p37 = por %p35, %p36
      %p39 = scmp.ne.s32.totalorder %s24, %s38
      %p40 = scmp.eq.s32.totalorder %s19, 0
      %p41 = por %p39, %p40
      %s43 = sadd.s32 %s42, 1
      %p46 = scmp.eq.s32.totalorder %s13, 1
      %p47 = scmp.ne.s32.totalorder %s42, %s44
      %p48 = scmp.eq.s32.totalorder %s13, 0
      %p49 = por %p47, %p48
      %p50 = scmp.ne.s32.totalorder %s42, %s44
      %p51 = scmp.eq.s32.totalorder %s18, 1
      %p52 = por %p50, %p51
      %p53 = scmp.ne.s32.totalorder %s44, %s45
      %p54 = scmp.eq.s32.totalorder %s18, 0
      %p55 = por %p53, %p54
      %p56 = scmp.ne.s32.totalorder %s44, %s45
      %p57 = scmp.eq.s32.totalorder %s19, 1
      %p58 = por %p56, %p57
      %p60 = scmp.ne.s32.totalorder %s45, %s59
      %p61 = scmp.eq.s32.totalorder %s19, 0
      %p62 = por %p60, %p61
      %s64 = sadd.s32 %s63, 1
      %p67 = scmp.eq.s32.totalorder %s13, 1
      %p68 = scmp.ne.s32.totalorder %s63, %s65
      %p69 = scmp.eq.s32.totalorder %s13, 0
      %p70 = por %p68, %p69
      %p71 = scmp.ne.s32.totalorder %s63, %s65
      %p72 = scmp.eq.s32.totalorder %s18, 1
      %p73 = por %p71, %p72
      %p74 = scmp.ne.s32.totalorder %s65, %s66
      %p75 = scmp.eq.s32.totalorder %s18, 0
      %p76 = por %p74, %p75
      %p77 = scmp.ne.s32.totalorder %s65, %s66
      %p78 = scmp.eq.s32.totalorder %s19, 1
      %p79 = por %p77, %p78
      %p81 = scmp.ne.s32.totalorder %s66, %s80
      %p82 = scmp.eq.s32.totalorder %s19, 0
      %p83 = por %p81, %p82
      %s84 = ssub.s32 %s13, %s20
      %p85 = scmp.eq.s32.totalorder %s84, 0
      %s87 = sadd.s32 %s86, 1
      %s88 = scalar_select %p85, %s86, %s87
      %p91 = pneg %p85
      %p92 = scmp.eq.s32.totalorder %s13, 1
      %p93 = por %p91, %p92
      %p94 = scmp.ne.s32.totalorder %s86, %s89
      %p95 = scmp.eq.s32.totalorder %s13, 0
      %p96 = por %p94, %p95
      %p97 = scmp.ne.s32.totalorder %s86, %s89
      %p98 = scmp.eq.s32.totalorder %s18, 1
      %p99 = por %p97, %p98
      %p100 = scmp.ne.s32.totalorder %s89, %s90
      %p101 = scmp.eq.s32.totalorder %s18, 0
      %p102 = por %p100, %p101
      %p103 = scmp.ne.s32.totalorder %s89, %s90
      %p104 = scmp.eq.s32.totalorder %s19, 1
      %p105 = por %p103, %p104
      %p107 = scmp.ne.s32.totalorder %s90, %s106
      %p108 = scmp.eq.s32.totalorder %s19, 0
      %p109 = por %p107, %p108
      %p110 = scmp.le.s32.totalorder 1, %s13
      %p111 = scmp.lt.s32.totalorder %s13, 3
      %p112 = pnand %p110, %p111
      %p113 = pneg %p112
      // Predicated region
      $region9: #{tpu_custom_call.1} parent=5 // pred_check
        _
      $region10: #{tpu_custom_call.1} parent=5 // pred_check_branch
        %115 = sbr.rel (%p112) target = $region12
      $region11: #{tpu_custom_call.1} parent=5 // pred_region
        %s116 = ssub.s32 %s13, 1
        // Predicated region
        $region13: #{tpu_custom_call.1} parent=11 // pred_check
          %p117 = pneg %p34
        $region14: #{tpu_custom_call.1} parent=11 // pred_check_branch
          %119 = sbr.rel (%p117) target = $region16
        $region15: #{tpu_custom_call.1} parent=11 // pred_region
          %s121 = ssub.s32 16, 16
          %122 = vsyncadd [#allocation3], %s121
          %s124 = sshll.u32 [#allocation2], 4
          %s125 = int_to_ptr.vmem [resolvable:$true] %s124
          %127 = dma.hbm_to_vmem [thread:$0]  %s0, 16, %s125, [#allocation3]
        $region16: #{tpu_custom_call.1} parent=11 // pred_fallthru
          _
        // Predicated region
        $region17: #{tpu_custom_call.1} parent=11 // pred_check
          %p128 = pneg %p55
        $region18: #{tpu_custom_call.1} parent=11 // pred_check_branch
          %130 = sbr.rel (%p128) target = $region20
        $region19: #{tpu_custom_call.1} parent=11 // pred_region
          _
        $region20: #{tpu_custom_call.1} parent=11 // pred_fallthru
          _
        // Predicated region
        $region21: #{tpu_custom_call.1} parent=11 // pred_check
          %p131 = pneg %p76
        $region22: #{tpu_custom_call.1} parent=11 // pred_check_branch
          %133 = sbr.rel (%p131) target = $region24
        $region23: #{tpu_custom_call.1} parent=11 // pred_region
          _
        $region24: #{tpu_custom_call.1} parent=11 // pred_fallthru
          _
      $region12: #{tpu_custom_call.1} parent=5 // pred_fallthru
        _
      %p134 = scmp.lt.s32.totalorder %s13, 2
      // Predicated region
      $region25: #{tpu_custom_call.1} parent=5 // pred_check
        %p135 = pneg %p134
      $region26: #{tpu_custom_call.1} parent=5 // pred_check_branch
        %137 = sbr.rel (%p135) target = $region28
      $region27: #{tpu_custom_call.1} parent=5 // pred_region
        _
      $region28: #{tpu_custom_call.1} parent=5 // pred_fallthru
        _
      %p138 = scmp.le.s32.totalorder 1, %s13
      %p139 = scmp.lt.s32.totalorder %s13, 3
      %p140 = pnand %p138, %p139
      %p141 = pneg %p140
      // Predicated region
      $region29: #{tpu_custom_call.1} parent=5 // pred_check
        _
      $region30: #{tpu_custom_call.1} parent=5 // pred_check_branch
        %143 = sbr.rel (%p140) target = $region32
      $region31: #{tpu_custom_call.1} parent=5 // pred_region
        %s144 = ssub.s32 %s13, 1
        // Predicated region
        $region33: #{tpu_custom_call.1} parent=31 // pred_check
          %p145 = pneg %p34
        $region34: #{tpu_custom_call.1} parent=31 // pred_check_branch
          %147 = sbr.rel (%p145) target = $region36
        $region35: #{tpu_custom_call.1} parent=31 // pred_region
          %148 = dma.done [#allocation3], 16
        $region36: #{tpu_custom_call.1} parent=31 // pred_fallthru
          _
        %p149 = pneg %p34
        %p150 = pneg %p31
        %p151 = pneg %p55
        %p152 = pneg %p52
        %p153 = pneg %p76
        %p154 = pneg %p73
        %p155 = pneg %p102
        %p156 = pneg %p99
        %s157 = sand.u32 %s89, 1
        %s158 = scalar_lea.sflag [#allocation4], %s157
        %s159 = sand.u32 %s89, 1
        %s160 = smul.addr %s159, 32
        %s161 = scalar_lea.vmem [#allocation5], %s160
        %s162 = smul.u32 %s18, 8
        %v163 = vlaneseq
        %v164 = vshrl.u32 %v163, 7
        %v165 = vstv %s162
        %v166 = vadd.s32 %v164, %v165
        %v167 = vcvt.s32.f32 %v166
        %v168 = vrcp.pop 15.000001
        %v169 = vmul.f32 %v167, %v168
        %v170 = vmul.f32 %v169, 6.2831855
        %v171 = vld [vmem:[#allocation2] sm:$0x1]
        %v173 = vlaneseq
        %v174 = vshrl.u32 %v173, 7
        %v175 = vsub.s32 0, %v174
        %v176 = vrot.slane %v171, %v175
        %v178 = vmul.f32 %v170, %v176
        %v179 = vld [vmem:[%s1] sm:$0x1]
        %v181 = vlaneseq
        %v182 = vshrl.u32 %v181, 7
        %v183 = vsub.s32 0, %v182
        %v184 = vrot.slane %v179, %v183
        %v186 = vadd.f32 %v178, %v184
        %v187 = vand.u32 2147483647, %v186
        %vm188 = vcmp.le.f32.partialorder %v187, 0.7853982
        %vm189 = vcmp.lt.s32.totalorder %v186, 0
        %v190 = vand.u32 %v186, 2139095040
        %v191 = vshrl.u32 %v190, 23
        %v192 = vsub.s32 %v191, 127
        %v193 = vand.u32 2147483647, %v186
        %v194 = vand.u32 %v193, 8388607
        %v195 = vor.u32 %v194, 8388608
        %v196 = vsub.s32 0, %v195
        %v197 = vadd.s32 %v192, 1
        %vm198 = vcmp.gt.s32.totalorder %v197, 0
        %v199 = vsel %vm198, %v197, 0
        %v200 = vshrl.u32 %v199, 5
        %v201 = vand.u32 %v199, 31
        %v202 = vsub.s32 32, %v201
        %v203 = vshrl.u32 683565275, %v202
        %v204 = vshll.u32 683565275, %v201
        %v205 = vshrl.u32 2475754826, %v202
        %v206 = vor.u32 %v204, %v205
        %v207 = vshll.u32 2475754826, %v201
        %v208 = vshrl.u32 2131351028, %v202
        %v209 = vor.u32 %v207, %v208
        %v210 = vshll.u32 2131351028, %v201
        %v211 = vshrl.u32 2102212464, %v202
        %v212 = vor.u32 %v210, %v211
        %v213 = vshll.u32 2102212464, %v201
        %v214 = vshrl.u32 920167782, %v202
        %v215 = vor.u32 %v213, %v214
        %v216 = vshll.u32 920167782, %v201
        %v217 = vshrl.u32 1326507024, %v202
        %v218 = vor.u32 %v216, %v217
        %vm219 = vcmp.lt.s32.totalorder %v200, 1
        %vm220 = vcmp.lt.s32.totalorder %v200, 2
        %vm221 = vcmp.lt.s32.totalorder %v200, 3
        %vm222 = vcmp.lt.s32.totalorder %v200, 4
        %v223 = vsel %vm219, %v203, %v206
        %v224 = vsel %vm222, %v212, 2102212464
        %v225 = vsel %vm221, %v209, %v224
        %v226 = vsel %vm220, %v223, %v225
        %v227 = vsel %vm219, %v206, %v209
        %v228 = vsel %vm222, %v215, 920167782
        %v229 = vsel %vm221, %v212, %v228
        %v230 = vsel %vm220, %v227, %v229
        %v231 = vsel %vm219, %v209, %v212
        %v232 = vsel %vm222, %v218, 1326507024
        %v233 = vsel %vm221, %v215, %v232
        %v234 = vsel %vm220, %v231, %v233
        %v235 = vshll.u32 %v195, 8
        %v236 = vmul.u32.u64.compose %v235, %v234
        %v237 = vextract.low.u32 %v236
        %v238 = vextract.high.u32 %v236
        %v239 = vmul.u32.u64.compose %v235, %v230
        %v240 = vextract.low.u32 %v239
        %v241 = vextract.high.u32 %v239
        %v242 = vmul.u32 %v235, %v226
        %v243 = vadd.s32 %v238, %v240
        %vm244 = vc.u32 %v238, %v240
        %v245 = vadd.s32 %v241, 1
        %v246 = vsel %vm244, %v245, %v241
        %v247 = vadd.s32 %v242, %v246
        %v248 = vadd.s32 %v247, 536870912
        %v249 = vshrl.u32 %v248, 30
        %v250 = vshll.u32 %v249, 30
        %v251 = vsub.s32 %v247, %v250
        %vm252 = vcmp.lt.s32.totalorder %v251, 0
        %v253 = vsub.s32 0, %v251
        %v254 = vsel %vm252, %v253, %v251
        %v255 = vclz %v254
        %v256 = vsub.s32 %v255, 2
        %vm257 = vcmp.gt.s32.totalorder 0, %v256
        %v258 = vsel %vm257, 0, %v256
        %v259 = vsub.s32 32, %v258
        %v260 = vshll.u32 %v251, %v258
        %v261 = vshrl.u32 %v243, %v259
        %v262 = vor.u32 %v260, %v261
        %v263 = vsub.s32 4294967266, %v258
        %v264 = vadd.s32 %v263, 127
        %v265 = vshll.u32 %v264, 23
        %v266 = vor.u32 4788187, %v265
        %v267 = vand.u32 2147483647, %v266
        %v269 = vcvt.s32.f32 %v262
        %v270 = vmul.f32 %v269, %v267
        %v271 = vxor.u32 %v270, 2147483648
        %v272 = vsel %vm189, %v271, %v270
        %v273 = vsub.s32 4, %v249
        %v274 = vsel %vm189, %v273, %v249
        %v275 = vsel %vm188, %v186, %v272
        %v276 = vsel %vm188, 0, %v274
        %v277 = vcosq.f32.pop %v275
        %v278 = vsinq.f32.pop %v275
        %vm279 = vweird.f32 %v186
        %v280 = vadd.s32 %v276, 3
        %v281 = vand.u32 %v280, 3
        %vm282 = vcmp.lt.s32.totalorder %v281, 2
        %vm283 = vcmp.eq.s32.totalorder %v281, 0
        %v284 = vxor.u32 %v278, 2147483648
        %v285 = vsel %vm283, %v277, %v284
        %vm286 = vcmp.eq.s32.totalorder %v281, 2
        %v287 = vxor.u32 %v277, 2147483648
        %v288 = vsel %vm286, %v287, %v278
        %v289 = vsel %vm282, %v285, %v288
        %v290 = vsel %vm279, nan, %v289
        %v291 = vld [vmem:[%s2] sm:$0xf]
        %v293 = vlaneseq
        %v294 = vshrl.u32 %v293, 7
        %v295 = vsub.s32 0, %v294
        %v296 = vrot.slane %v291, %v295
        %v297 = vlaneseq
        %v298 = vshrl.u32 %v297, 7
        %v299 = vsub.s32 1, %v298
        %v300 = vrot.slane %v291, %v299
        %v301 = vlaneseq
        %v302 = vshrl.u32 %v301, 7
        %v303 = vsub.s32 2, %v302
        %v304 = vrot.slane %v291, %v303
        %v305 = vlaneseq
        %v306 = vshrl.u32 %v305, 7
        %v307 = vsub.s32 3, %v306
        %v308 = vrot.slane %v291, %v307
        %v313 = vadd.f32 %v290, %v296
        %v314 = vadd.f32 %v290, %v300
        %v315 = vadd.f32 %v290, %v304
        %v316 = vadd.f32 %v290, %v308
        %317 = vst [vmem:[%s161] sm:$0xff] %v313
        %318 = vst [vmem:[%s161 + $0x8] sm:$0xff] %v314
        %319 = vst [vmem:[%s161 + $0x10] sm:$0xff] %v315
        %320 = vst [vmem:[%s161 + $0x18] sm:$0xff] %v316
        %s321 = sand.u32 %s89, 1
        %s322 = scalar_lea.sflag [#allocation4], %s321
        %s323 = sand.u32 %s89, 1
        %s324 = smul.addr %s323, 32
        %s325 = scalar_lea.vmem [#allocation5], %s324
        // Predicated region
        $region37: #{tpu_custom_call.1} parent=31 // pred_check
          %p326 = pneg %p99
        $region38: #{tpu_custom_call.1} parent=31 // pred_check_branch
          %328 = sbr.rel (%p326) target = $region40
        $region39: #{tpu_custom_call.1} parent=31 // pred_region
          %s330 = ssub.s32 512, 512
          %331 = vsyncadd %s322, %s330
          %s332 = smul.addr %s18, 4
          %s333 = smul.addr %s332, 128
          %s334 = scalar_lea.hbm %s3, %s333
          %s336 = sshll.u32 %s325, 4
          %s337 = int_to_ptr.vmem [resolvable:$true] %s336
          %339 = dma.vmem_to_hbm [thread:$0]  %s337, 512, %s334, %s322
        $region40: #{tpu_custom_call.1} parent=31 // pred_fallthru
          _
      $region32: #{tpu_custom_call.1} parent=5 // pred_fallthru
        _
      %p340 = scmp.le.s32.totalorder 2, %s13
      // Predicated region
      $region41: #{tpu_custom_call.1} parent=5 // pred_check
        %p341 = pneg %p340
      $region42: #{tpu_custom_call.1} parent=5 // pred_check_branch
        %343 = sbr.rel (%p341) target = $region44
      $region43: #{tpu_custom_call.1} parent=5 // pred_region
        %s344 = ssub.s32 %s13, 2
        // Predicated region
        $region45: #{tpu_custom_call.1} parent=43 // pred_check
          %p345 = pneg %p105
        $region46: #{tpu_custom_call.1} parent=43 // pred_check_branch
          %347 = sbr.rel (%p345) target = $region48
        $region47: #{tpu_custom_call.1} parent=43 // pred_region
          %s348 = sand.u32 %s90, 1
          %s349 = scalar_lea.sflag [#allocation4], %s348
          %s350 = sand.u32 %s90, 1
          %s351 = smul.addr %s350, 32
          %s352 = scalar_lea.vmem [#allocation5], %s351
          %353 = dma.done %s349, 512
        $region48: #{tpu_custom_call.1} parent=43 // pred_fallthru
          _
      $region44: #{tpu_custom_call.1} parent=5 // pred_fallthru
        _
    $region6: #{tpu_custom_call.1} parent=1 // loop_footer
      %s17 = sadd.s32 1, %s13
    $region7: #{tpu_custom_call.1} parent=1 // loop_footer_branch
      %12 = sbr.rel target = $region3
    $region8: #{tpu_custom_call.1} parent=1 // loop_exit
      _
    %354 = vsyncpa [#allocation3], 1
    %s355 = scalar_lea.sflag [#allocation3], 1
    %356 = vsyncpa %s355, 1
    %357 = vsyncpa [#allocation4], 1
    %s358 = scalar_lea.sflag [#allocation4], 1
    %359 = vsyncpa %s358, 1

</llo_original>
